<compile_context>
chip_gen: v7x
topology: tpu7x:2x2x1
jax: 0.10.0
libtpu: 0.0.40
codegen_flags: <defaults>
</compile_context>

<pallas_src>
import functools
import math

import jax
import jax.numpy as jnp
from jax.experimental import pallas as pl
from jax.experimental.pallas import tpu as pltpu


# ----------------------------------------------------------------------------
# helpers
# ----------------------------------------------------------------------------

def _tile(n, pref, floor=128):
    """Tile for a weight-side (N/K) dim: preferred tile if it divides n, else
    halve down to `floor`, else the full dim (block == full dim is always a
    legal BlockSpec). Real ViT dims (multiples of 128) take a tiled path."""
    t = min(pref, n)
    while t > floor and n % t != 0:
        t //= 2
    return t if n % t == 0 else n


def _row_tile(m, pref):
    """Row (M) tile: full dim when m <= pref, else the preferred tile with a
    ragged last block (grid uses pl.cdiv). OOB rows read garbage and their
    writes are masked; every row kernel here is row-independent."""
    return m if m <= pref else pref


def _apply_act(y, act, gelu_approx):
    if act == "gelu":
        if gelu_approx:
            # tanh GELU -> EUP tanh (v5e-friendly epilogue).
            # TODO(synk): torch nn.GELU() default is exact erf; set
            # gelu_approx=False for exact parity (max |delta| ~3e-3).
            c = math.sqrt(2.0 / math.pi)
            return 0.5 * y * (1.0 + jnp.tanh(c * (y + 0.044715 * (y * y * y))))
        return 0.5 * y * (1.0 + jax.lax.erf(y * (1.0 / math.sqrt(2.0))))
    return y


# ----------------------------------------------------------------------------
# Pallas kernels
# ----------------------------------------------------------------------------

def _matmul_kernel(*refs, act, has_residual, gelu_approx):
    """Tiled x @ w with f32 accumulator; bias / GELU / residual fused into the
    finalize branch (last K step) so the inner loop is pure MXU."""
    if has_residual:
        x_ref, w_ref, b_ref, r_ref, o_ref, acc_ref = refs
    else:
        x_ref, w_ref, b_ref, o_ref, acc_ref = refs
        r_ref = None

    @pl.when(pl.program_id(2) == 0)
    def _init():
        acc_ref[...] = jnp.zeros_like(acc_ref)

    acc_ref[...] += jnp.dot(x_ref[...], w_ref[...],
                            preferred_element_type=jnp.float32)

    @pl.when(pl.program_id(2) == pl.num_programs(2) - 1)
    def _finalize():
        y = acc_ref[...] + b_ref[...].astype(jnp.float32)
        y = _apply_act(y, act, gelu_approx)
        if r_ref is not None:
            y = y + r_ref[...].astype(jnp.float32)
        o_ref[...] = y.astype(o_ref.dtype)


def matmul(x, w, b, residual=None, act="none", *, tm=256, tn=256, tk=512,
           gelu_approx=True):
    """x: (M, K) @ w: (K, N) + b  [+ residual] [GELU]; f32 accumulation."""
    M, K = x.shape
    _, N = w.shape
    tm, tn, tk = _row_tile(M, tm), _tile(N, tn), _tile(K, tk)
    grid = (pl.cdiv(M, tm), N // tn, K // tk)

    in_specs = [
        pl.BlockSpec((tm, tk), lambda i, j, k: (i, k)),
        pl.BlockSpec((tk, tn), lambda i, j, k: (k, j)),
        pl.BlockSpec((1, tn), lambda i, j, k: (0, j)),
    ]
    inputs = [x, w, b.reshape(1, N)]
    if residual is not None:
        in_specs.append(pl.BlockSpec((tm, tn), lambda i, j, k: (i, j)))
        inputs.append(residual)

    kernel = functools.partial(_matmul_kernel, act=act,
                               has_residual=residual is not None,
                               gelu_approx=gelu_approx)
    return pl.pallas_call(
        kernel,
        out_shape=jax.ShapeDtypeStruct((M, N), x.dtype),
        grid=grid,
        in_specs=in_specs,
        out_specs=pl.BlockSpec((tm, tn), lambda i, j, k: (i, j)),
        scratch_shapes=[pltpu.VMEM((tm, tn), jnp.float32)],
        compiler_params=pltpu.CompilerParams(
            dimension_semantics=("parallel", "parallel", "arbitrary")),
    )(*inputs)


def _ln_matmul_kernel(x_ref, g_ref, bta_ref, w_ref, b_ref, o_ref, xn_ref, *,
                      act, eps, gelu_approx):
    """LayerNorm fused into the following matmul. The (tm, K) row tile is
    normalized ONCE per row tile (N is the inner 'arbitrary' grid axis) and
    cached in a VMEM scratch in the streaming dtype."""
    @pl.when(pl.program_id(1) == 0)
    def _normalize():
        x = x_ref[...].astype(jnp.float32)
        mean = jnp.mean(x, axis=-1, keepdims=True)
        xc = x - mean
        var = jnp.mean(xc * xc, axis=-1, keepdims=True)
        h = xc * jax.lax.rsqrt(var + eps)
        h = h * g_ref[...].astype(jnp.float32) + bta_ref[...].astype(jnp.float32)
        xn_ref[...] = h.astype(xn_ref.dtype)

    y = jnp.dot(xn_ref[...], w_ref[...], preferred_element_type=jnp.float32)
    y = y + b_ref[...].astype(jnp.float32)
    y = _apply_act(y, act, gelu_approx)
    o_ref[...] = y.astype(o_ref.dtype)


def ln_matmul(x, gamma, beta, w, b, act="none", eps=1e-6, *, tm=256, tn=512,
              gelu_approx=True):
    """LayerNorm(x) @ w + b (optional GELU). x: (M, K), w: (K, N)."""
    M, K = x.shape
    _, N = w.shape
    tm, tn = _row_tile(M, tm), _tile(N, tn)
    grid = (pl.cdiv(M, tm), N // tn)
    kernel = functools.partial(_ln_matmul_kernel, act=act, eps=eps,
                               gelu_approx=gelu_approx)
    return pl.pallas_call(
        kernel,
        out_shape=jax.ShapeDtypeStruct((M, N), x.dtype),
        grid=grid,
        in_specs=[
            pl.BlockSpec((tm, K), lambda i, j: (i, 0)),
            pl.BlockSpec((1, K), lambda i, j: (0, 0)),
            pl.BlockSpec((1, K), lambda i, j: (0, 0)),
            pl.BlockSpec((K, tn), lambda i, j: (0, j)),
            pl.BlockSpec((1, tn), lambda i, j: (0, j)),
        ],
        out_specs=pl.BlockSpec((tm, tn), lambda i, j: (i, j)),
        scratch_shapes=[pltpu.VMEM((tm, K), x.dtype)],
        compiler_params=pltpu.CompilerParams(
            dimension_semantics=("parallel", "arbitrary")),
    )(x, gamma.reshape(1, K), beta.reshape(1, K), w, b.reshape(1, N))


def _layernorm_kernel(x_ref, g_ref, b_ref, o_ref, *, eps):
    x = x_ref[...].astype(jnp.float32)
    mean = jnp.mean(x, axis=-1, keepdims=True)
    xc = x - mean
    var = jnp.mean(xc * xc, axis=-1, keepdims=True)
    y = xc * jax.lax.rsqrt(var + eps)
    o_ref[...] = (y * g_ref[...].astype(jnp.float32)
                  + b_ref[...].astype(jnp.float32)).astype(o_ref.dtype)


def layernorm(x, gamma, beta, eps=1e-6, *, tm=256):
    """Standalone final LayerNorm, tiled over rows (ragged last block)."""
    M, D = x.shape
    tm = _row_tile(M, tm)
    return pl.pallas_call(
        functools.partial(_layernorm_kernel, eps=eps),
        out_shape=jax.ShapeDtypeStruct((M, D), x.dtype),
        grid=(pl.cdiv(M, tm),),
        in_specs=[
            pl.BlockSpec((tm, D), lambda i: (i, 0)),
            pl.BlockSpec((1, D), lambda i: (0, 0)),
            pl.BlockSpec((1, D), lambda i: (0, 0)),
        ],
        out_specs=pl.BlockSpec((tm, D), lambda i: (i, 0)),
        compiler_params=pltpu.CompilerParams(
            dimension_semantics=("parallel",)),
    )(x, gamma.reshape(1, D), beta.reshape(1, D))


def _attn_kernel(q_ref, kv_ref, o_ref, *, heads):
    """Multi-head attention for one (batch, query-tile) program.
    q_ref : (1, tq, 3D) query rows (only the first D lanes are used; the
            softmax scale is pre-folded into the q projection host-side).
    kv_ref: (1, T, 3D) all key/value rows for this batch element (resident
            across the query-tile axis).
    Heads are processed with per-head *ref* slices and stored directly into
    the lane-dense (1, tq, D) output block (no concat / relayout)."""
    D3 = kv_ref.shape[-1]
    D = D3 // 3
    Dh = D // heads
    dt = kv_ref.dtype
    exp_in_f32 = jnp.dtype(dt) == jnp.dtype(jnp.float32)

    # TODO(synk): process heads in pairs (or pad head dim to 128 host-side) so
    # q/k/v slices and output stores are 128-lane aligned when Dh == 64.
    for h in range(heads):                                       # static, small
        qh = q_ref[0, :, h * Dh:(h + 1) * Dh]                    # (tq, Dh)
        kh = kv_ref[0, :, D + h * Dh:D + (h + 1) * Dh]           # (T,  Dh)
        vh = kv_ref[0, :, 2 * D + h * Dh:2 * D + (h + 1) * Dh]   # (T,  Dh)
        s = jax.lax.dot_general(qh, kh, (((1,), (1,)), ((), ())),
                                preferred_element_type=jnp.float32)  # (tq, T)
        z = s - jnp.max(s, axis=-1, keepdims=True)
        # exp in the streaming dtype when bf16 (bf16 EUP on v6e/v7x); the row
        # sum / reciprocal stay f32.
        p = jnp.exp(z) if exp_in_f32 else jnp.exp(z.astype(dt))
        denom = jnp.sum(p.astype(jnp.float32), axis=-1, keepdims=True)
        inv = pl.reciprocal(denom, approx=True)                  # (tq, 1) f32
        oh = jnp.dot(p.astype(dt), vh, preferred_element_type=jnp.float32)
        o_ref[0, :, h * Dh:(h + 1) * Dh] = (oh * inv).astype(o_ref.dtype)


def attention(qkv, heads, *, tq=256):
    """qkv: (B, T, 3D) with q pre-scaled -> (B, T, D).
    Grid = (B, ceil(T/tq)): > B programs (helps v7x's 2 TCs) and a bounded
    per-program working set; the k/v block stays resident across query tiles."""
    B, T, D3 = qkv.shape
    D = D3 // 3
    assert D % heads == 0
    tq = _row_tile(T, tq)
    kernel = functools.partial(_attn_kernel, heads=heads)
    return pl.pallas_call(
        kernel,
        out_shape=jax.ShapeDtypeStruct((B, T, D), qkv.dtype),
        grid=(B, pl.cdiv(T, tq)),
        in_specs=[
            # query rows (full 3D lane extent so the demo's tiny D stays legal;
            # only the first D lanes are read in-kernel)
            pl.BlockSpec((1, tq, D3), lambda b, qi: (b, qi, 0)),
            # all key/value rows, resident across the query-tile axis
            pl.BlockSpec((1, T, D3), lambda b, qi: (b, 0, 0)),
        ],
        out_specs=pl.BlockSpec((1, tq, D), lambda b, qi: (b, qi, 0)),
        compiler_params=pltpu.CompilerParams(
            dimension_semantics=("parallel", "parallel"),
            vmem_limit_bytes=64 * 1024 * 1024),
    )(qkv, qkv)


# ----------------------------------------------------------------------------
# Model (DINO-v1 ViT encoder) built from the kernels above
# ----------------------------------------------------------------------------

def init_params(key, *, C, P, D, depth, heads, mlp_hidden, num_tokens):
    ks = jax.random.split(key, 4 + depth)
    s = 0.02

    def nrm(k, shape):
        return (s * jax.random.normal(k, shape)).astype(jnp.float32)

    params = {
        # patch-embed conv weight in PyTorch layout (D, C, P, P), plus bias
        "patch_w": nrm(ks[0], (D, C, P, P)),
        "patch_b": jnp.zeros((D,), jnp.float32),
        "cls_token": nrm(ks[1], (1, 1, D)),
        "pos_embed": nrm(ks[2], (1, num_tokens, D)),
        "norm_g": jnp.ones((D,), jnp.float32),
        "norm_b": jnp.zeros((D,), jnp.float32),
        "blocks": [],
    }
    for i in range(depth):
        bk = jax.random.split(ks[4 + i], 4)
        params["blocks"].append({
            "ln1_g": jnp.ones((D,), jnp.float32),
            "ln1_b": jnp.zeros((D,), jnp.float32),
            "qkv_w": nrm(bk[0], (D, 3 * D)),
            "qkv_b": jnp.zeros((3 * D,), jnp.float32),
            "proj_w": nrm(bk[1], (D, D)),
            "proj_b": jnp.zeros((D,), jnp.float32),
            "ln2_g": jnp.ones((D,), jnp.float32),
            "ln2_b": jnp.zeros((D,), jnp.float32),
            "fc1_w": nrm(bk[2], (D, mlp_hidden)),
            "fc1_b": jnp.zeros((mlp_hidden,), jnp.float32),
            "fc2_w": nrm(bk[3], (mlp_hidden, D)),
            "fc2_b": jnp.zeros((D,), jnp.float32),
        })
    return params


def prepare_params(params, heads, compute_dtype):
    """Host-side parameter prep: fold the softmax scale into the q columns of
    the qkv projection (zero in-kernel cost) and cast everything once to the
    streaming dtype (bf16 for MXU-rate streaming on v6e/v7x)."""
    D = params["patch_w"].shape[0]
    scale = (D // heads) ** -0.5

    def cast(v):
        return v.astype(compute_dtype)

    out = {k: cast(v) for k, v in params.items() if k != "blocks"}
    out["blocks"] = []
    for blk in params["blocks"]:
        b = {k: cast(v) for k, v in blk.items()}
        qkv_w = blk["qkv_w"].at[:, :D].multiply(scale)   # pre-scale in f32
        qkv_b = blk["qkv_b"].at[:D].multiply(scale)
        b["qkv_w"] = cast(qkv_w)
        b["qkv_b"] = cast(qkv_b)
        out["blocks"].append(b)
    return out


def patch_embed(x_nchw, w, b, P):
    """Strided-conv patch embedding expressed as a tiled Pallas matmul."""
    # TODO(synk): im2col runs as XLA reshape/transpose; could be folded into
    # the matmul's index_map for very large images.
    B, C, H, W = x_nchw.shape
    Hp, Wp = H // P, W // P
    patches = x_nchw.reshape(B, C, Hp, P, Wp, P)
    patches = patches.transpose(0, 2, 4, 1, 3, 5).reshape(B * Hp * Wp, C * P * P)
    w2 = w.reshape(w.shape[0], C * P * P).T                   # (C*P*P, D)
    out = matmul(patches, w2, b)
    return out.reshape(B, Hp * Wp, w.shape[0])


def encoder_block(x, p, heads):
    """x: (B, T, D). Pre-LN transformer block (timm ViT / DINO-v1 style)."""
    B, T, D = x.shape
    x2d = x.reshape(B * T, D)

    # --- attention: LN1 + qkv fused (q already pre-scaled host-side) ---
    qkv = ln_matmul(x2d, p["ln1_g"], p["ln1_b"], p["qkv_w"], p["qkv_b"])
    o = attention(qkv.reshape(B, T, 3 * D), heads)            # (B, T, D)
    # output projection with the residual add fused into the matmul epilogue
    x2d = matmul(o.reshape(B * T, D), p["proj_w"], p["proj_b"], residual=x2d)

    # --- MLP: LN2 + fc1 + GELU fused; fc2 with fused residual ---
    h = ln_matmul(x2d, p["ln2_g"], p["ln2_b"], p["fc1_w"], p["fc1_b"], act="gelu")
    x2d = matmul(h, p["fc2_w"], p["fc2_b"], residual=x2d)
    return x2d.reshape(B, T, D)


def ae_encode(img_nchw, params, *, patch_size, heads, encoder_cls_token=False,
              compute_dtype=jnp.float32):
    """AE.forward(img, behaviour='enc') == AE.encode_dinov1(img)."""
    p = prepare_params(params, heads, compute_dtype)
    B = img_nchw.shape[0]
    x = patch_embed(img_nchw.astype(compute_dtype), p["patch_w"], p["patch_b"],
                    patch_size)
    D = x.shape[-1]
    cls = jnp.broadcast_to(p["cls_token"], (B, 1, D))
    x = jnp.concatenate([cls, x], axis=1)
    x = x + p["pos_embed"]                                    # prepare_tokens
    for blk in p["blocks"]:
        x = encoder_block(x, blk, heads)
    T = x.shape[1]
    x2d = layernorm(x.reshape(B * T, D), p["norm_g"], p["norm_b"])
    x = x2d.reshape(B, T, D)
    if not encoder_cls_token:
        return x[:, 1:]                                       # drop cls token
    return x


# ----------------------------------------------------------------------------
# Pure-JAX reference (for the correctness check)
# ----------------------------------------------------------------------------

def _ref_ln(x, g, b, eps=1e-6):
    m = jnp.mean(x, -1, keepdims=True)
    v = jnp.mean((x - m) ** 2, -1, keepdims=True)
    return (x - m) / jnp.sqrt(v + eps) * g + b


def ae_encode_ref(img, params, *, patch_size, heads, encoder_cls_token=False):
    B, C, H, W = img.shape
    P = patch_size
    Hp, Wp = H // P, W // P
    pt = img.reshape(B, C, Hp, P, Wp, P).transpose(0, 2, 4, 1, 3, 5)
    pt = pt.reshape(B, Hp * Wp, C * P * P)
    D = params["patch_w"].shape[0]
    x = pt @ params["patch_w"].reshape(D, -1).T + params["patch_b"]
    cls = jnp.broadcast_to(params["cls_token"], (B, 1, D))
    x = jnp.concatenate([cls, x], axis=1) + params["pos_embed"]
    T = x.shape[1]
    Dh = D // heads
    for p in params["blocks"]:
        h = _ref_ln(x, p["ln1_g"], p["ln1_b"])
        qkv = h @ p["qkv_w"] + p["qkv_b"]
        qkv = qkv.reshape(B, T, 3, heads, Dh).transpose(2, 0, 3, 1, 4)
        q, k, v = qkv[0], qkv[1], qkv[2]
        s = jnp.einsum("bhtd,bhsd->bhts", q, k) * (Dh ** -0.5)
        a = jax.nn.softmax(s, axis=-1)
        o = jnp.einsum("bhts,bhsd->bhtd", a, v)
        o = o.transpose(0, 2, 1, 3).reshape(B, T, D) @ p["proj_w"] + p["proj_b"]
        x = x + o
        h = _ref_ln(x, p["ln2_g"], p["ln2_b"])
        # matches the kernel's default tanh-approx GELU
        h = jax.nn.gelu(h @ p["fc1_w"] + p["fc1_b"], approximate=True)
        x = x + (h @ p["fc2_w"] + p["fc2_b"])
    x = _ref_ln(x, params["norm_g"], params["norm_b"])
    return x if encoder_cls_token else x[:, 1:]


# ----------------------------------------------------------------------------
# Main
# ----------------------------------------------------------------------------

if __name__ == "__main__":
    B, C, H, W = 2, 3, 16, 16
    P = 8                      # patch size -> 4 patches + 1 cls = 5 tokens
    D = 32                     # encoder embed dim
    HEADS = 4
    DEPTH = 2
    MLP_HIDDEN = 4 * D
    NUM_TOKENS = (H // P) * (W // P) + 1

    key = jax.random.PRNGKey(0)
    k_img, k_par = jax.random.split(key)
    img = jax.random.normal(k_img, (B, C, H, W), dtype=jnp.float32)
    params = init_params(k_par, C=C, P=P, D=D, depth=DEPTH, heads=HEADS,
                         mlp_hidden=MLP_HIDDEN, num_tokens=NUM_TOKENS)

    ref = ae_encode_ref(img, params, patch_size=P, heads=HEADS,
                        encoder_cls_token=False)

    # f32 streaming: tight check against the pure-JAX reference
    out_f32 = ae_encode(img, params, patch_size=P, heads=HEADS,
                        encoder_cls_token=False, compute_dtype=jnp.float32)
    out_f32 = jax.block_until_ready(out_f32)
    assert out_f32.shape == (B, NUM_TOKENS - 1, D), out_f32.shape
    err32 = float(jnp.max(jnp.abs(out_f32 - ref)))
    # small slack for the approx-reciprocal softmax denominator
    assert err32 < 1e-2, err32

    # bf16 streaming (the MXU-rate path on v6e/v7x): f32 accumulation, looser
    # tolerance against the f32 reference.
    out_bf16 = ae_encode(img, params, patch_size=P, heads=HEADS,
                         encoder_cls_token=False, compute_dtype=jnp.bfloat16)
    out_bf16 = jax.block_until_ready(out_bf16)
    assert out_bf16.shape == (B, NUM_TOKENS - 1, D), out_bf16.shape
    err16 = float(jnp.max(jnp.abs(out_bf16.astype(jnp.float32) - ref)))
    assert err16 < 0.25, err16

    print("KERNEL_OK")
</pallas_src>

<mosaic_0001>
module attributes {stable_mosaic.version = 11 : i64} {
  func.func @_matmul_kernel(%arg0: i32, %arg1: i32, %arg2: i32, %arg3: memref<8x192xf32, #tpu.memory_space<vmem>>, %arg4: memref<192x32xf32, #tpu.memory_space<vmem>>, %arg5: memref<1x32xf32, #tpu.memory_space<vmem>>, %arg6: memref<8x32xf32, #tpu.memory_space<vmem>>, %arg7: memref<8x32xf32, #tpu.memory_space<vmem>>) attributes {dimension_semantics = [#tpu.dimension_semantics<parallel>, #tpu.dimension_semantics<parallel>, #tpu.dimension_semantics<arbitrary>], iteration_bounds = array<i64: 1, 1, 1>, scalar_prefetch = 0 : i64, scratch_operands = 1 : i64, tpu.core_type = #tpu.core_type<tc>, window_params = [{transform_indices = @transform_0, window_bounds = array<i64: 8, 192>}, {transform_indices = @transform_1, window_bounds = array<i64: 192, 32>}, {transform_indices = @transform_2, window_bounds = array<i64: 1, 32>}, {transform_indices = @transform_3, window_bounds = array<i64: 8, 32>}]} {
    %c0_i32 = arith.constant 0 : i32
    %0 = arith.cmpi eq, %arg2, %c0_i32 : i32
    %1 = arith.extui %0 : i1 to i32
    %c0_i32_0 = arith.constant 0 : i32
    %2 = arith.cmpi ne, %1, %c0_i32_0 : i32
    scf.if %2 {
      %cst_10 = arith.constant 0.000000e+00 : f32
      %12 = vector.broadcast %cst_10 : f32 to vector<8x32xf32>
      %c0_11 = arith.constant 0 : index
      %c0_12 = arith.constant 0 : index
      %13 = vector.load %arg7[%c0_11, %c0_12] : memref<8x32xf32, #tpu.memory_space<vmem>>, vector<8x32xf32>
      tpu.vector_store %arg7[%c0_11, %c0_12], %12 {strides = array<i32>} : memref<8x32xf32, #tpu.memory_space<vmem>>, vector<8x32xf32>,
    } else {
    }
    %c0 = arith.constant 0 : index
    %c0_1 = arith.constant 0 : index
    %3 = vector.load %arg7[%c0, %c0_1] : memref<8x32xf32, #tpu.memory_space<vmem>>, vector<8x32xf32>
    %c0_2 = arith.constant 0 : index
    %c0_3 = arith.constant 0 : index
    %4 = vector.load %arg3[%c0_2, %c0_3] : memref<8x192xf32, #tpu.memory_space<vmem>>, vector<8x192xf32>
    %c0_4 = arith.constant 0 : index
    %c0_5 = arith.constant 0 : index
    %5 = vector.load %arg4[%c0_4, %c0_5] : memref<192x32xf32, #tpu.memory_space<vmem>>, vector<192x32xf32>
    %cst = arith.constant dense<0.000000e+00> : vector<8x32xf32>
    %6 = tpu.matmul %4, %5, %cst {dimension_numbers = #tpu.dot_dimension_numbers<[1], [0], [0], [1], [0, 0, 1, 1], [], []>} : vector<8x192xf32>, vector<192x32xf32>, vector<8x32xf32> -> vector<8x32xf32>
    %7 = arith.addf %3, %6 : vector<8x32xf32>
    %c0_6 = arith.constant 0 : index
    %c0_7 = arith.constant 0 : index
    %8 = vector.load %arg7[%c0_6, %c0_7] : memref<8x32xf32, #tpu.memory_space<vmem>>, vector<8x32xf32>
    tpu.vector_store %arg7[%c0_6, %c0_7], %7 {strides = array<i32>} : memref<8x32xf32, #tpu.memory_space<vmem>>, vector<8x32xf32>,
    %c0_i32_8 = arith.constant 0 : i32
    %9 = arith.cmpi eq, %arg2, %c0_i32_8 : i32
    %10 = arith.extui %9 : i1 to i32
    %c0_i32_9 = arith.constant 0 : i32
    %11 = arith.cmpi ne, %10, %c0_i32_9 : i32
    scf.if %11 {
      %c0_10 = arith.constant 0 : index
      %c0_11 = arith.constant 0 : index
      %12 = vector.load %arg7[%c0_10, %c0_11] : memref<8x32xf32, #tpu.memory_space<vmem>>, vector<8x32xf32>
      %c0_12 = arith.constant 0 : index
      %c0_13 = arith.constant 0 : index
      %13 = vector.load %arg5[%c0_12, %c0_13] : memref<1x32xf32, #tpu.memory_space<vmem>>, vector<1x32xf32>
      %14 = vector.broadcast %13 : vector<1x32xf32> to vector<8x32xf32>
      %15 = arith.addf %12, %14 : vector<8x32xf32>
      %c0_14 = arith.constant 0 : index
      %c0_15 = arith.constant 0 : index
      %16 = vector.load %arg6[%c0_14, %c0_15] : memref<8x32xf32, #tpu.memory_space<vmem>>, vector<8x32xf32>
      tpu.vector_store %arg6[%c0_14, %c0_15], %15 {strides = array<i32>} : memref<8x32xf32, #tpu.memory_space<vmem>>, vector<8x32xf32>,
    } else {
    }
    return
  }
  func.func @transform_0(%arg0: i32, %arg1: i32, %arg2: i32) -> (i32, i32) {
    %c0_i32 = arith.constant 0 : i32
    return %arg0, %arg2 : i32, i32
  }
  func.func @transform_1(%arg0: i32, %arg1: i32, %arg2: i32) -> (i32, i32) {
    %c0_i32 = arith.constant 0 : i32
    return %arg2, %arg1 : i32, i32
  }
  func.func @transform_2(%arg0: i32, %arg1: i32, %arg2: i32) -> (i32, i32) {
    %c0_i32 = arith.constant 0 : i32
    %c0_i32_0 = arith.constant 0 : i32
    return %c0_i32, %arg1 : i32, i32
  }
  func.func @transform_3(%arg0: i32, %arg1: i32, %arg2: i32) -> (i32, i32) {
    %c0_i32 = arith.constant 0 : i32
    return %arg0, %arg1 : i32, i32
  }
}

</mosaic_0001>

<llo_original>
// kernel: tpu_custom_call.1
$region0: #{tpu_custom_call.1}
  #allocation0 [shape = 'u32[]', space=smem, size = 0x4, offset = 0x4, fixed_abs, tag = 'smem constant byte address 0x4 - core index']
  #allocation1 [shape = 'u32[144,128]{1,0:T(1,128)}', space=vmem, size = 0x12000, scoped, tag = 'internal scratch']
  #allocation2 [shape = 'f32[8,32]{1,0:T(8,128)}', space=vmem, size = 0x1000, scoped, tag = 'scratch operand']
  %s0 = inlined_call_operand.vmem [shape: f32[8,192], index: 0, kind: input, shape index: {}]
  %s1 = inlined_call_operand.vmem [shape: f32[192,32], index: 1, kind: input, shape index: {}]
  %s2 = inlined_call_operand.vmem [shape: f32[1,32], index: 2, kind: input, shape index: {}]
  %s3 = inlined_call_operand.hbm [shape: f32[8,32], index: 3, kind: output, shape index: {}]
  %s4 = sld [smem:[#allocation0]]
  $region30: #{tpu_custom_call.1} parent=0
    _
  %s6 = ssub.s32 1, %s4
  %s7 = scalar_select 0, %s6, %s4
  $region1: #{tpu_custom_call.1} parent=0
    #allocation3 [shape = 'u8[4096]{0}', space=vmem, size = 0x1000, scoped, tag = 'output window, operand 0, single buffered']
    #allocation4 [shape = 's32[1]{0}', space=sflag, size = 0x4, scoped, tag = 'scoped memory for tpu_custom_call.1']
    %8 = vsyncpa [#allocation4], 0
    // Predicated region
    $region2: #{tpu_custom_call.1} parent=1 // pred_check
      _
    $region3: #{tpu_custom_call.1} parent=1 // pred_check_branch
      %10 = sbr.rel (0) target = $region5
    $region4: #{tpu_custom_call.1} parent=1 // pred_region
      _
    $region5: #{tpu_custom_call.1} parent=1 // pred_fallthru
      _
    // Predicated region
    $region6: #{tpu_custom_call.1} parent=1 // pred_check
      _
    $region7: #{tpu_custom_call.1} parent=1 // pred_check_branch
      %12 = sbr.rel (0) target = $region9
    $region8: #{tpu_custom_call.1} parent=1 // pred_region
      _
    $region9: #{tpu_custom_call.1} parent=1 // pred_fallthru
      _
    // Predicated region
    $region10: #{tpu_custom_call.1} parent=1 // pred_check
      _
    $region11: #{tpu_custom_call.1} parent=1 // pred_check_branch
      %14 = sbr.rel (0) target = $region13
    $region12: #{tpu_custom_call.1} parent=1 // pred_region
      _
    $region13: #{tpu_custom_call.1} parent=1 // pred_fallthru
      _
    %p15 = scmp.eq.s32.totalorder 0, 0
    // Predicated region
    $region14: #{tpu_custom_call.1} parent=1 // pred_check
      %p16 = pneg %p15
    $region15: #{tpu_custom_call.1} parent=1 // pred_check_branch
      %18 = sbr.rel (%p16) target = $region17
    $region16: #{tpu_custom_call.1} parent=1 // pred_region
      %vm19 = vcmask 261120
      %20 = vst.msk [vmem:[#allocation2] sm:$0xff] %vm19, 0.0
    $region17: #{tpu_custom_call.1} parent=1 // pred_fallthru
      _
    %v21 = vld [vmem:[#allocation2] sm:$0xff]
    %v22 = vld [vmem:[%s0] sm:$0xff]
    %v23 = vld [vmem:[%s0 + $0x8] sm:$0xff]
    %v24 = vld [vmem:[%s1] sm:$0xff]
    %v25 = vld [vmem:[%s1 + $0x8] sm:$0xff]
    %v26 = vld [vmem:[%s1 + $0x10] sm:$0xff]
    %v27 = vld [vmem:[%s1 + $0x18] sm:$0xff]
    %v28 = vld [vmem:[%s1 + $0x20] sm:$0xff]
    %v29 = vld [vmem:[%s1 + $0x28] sm:$0xff]
    %v30 = vld [vmem:[%s1 + $0x30] sm:$0xff]
    %v31 = vld [vmem:[%s1 + $0x38] sm:$0xff]
    %v32 = vld [vmem:[%s1 + $0x40] sm:$0xff]
    %v33 = vld [vmem:[%s1 + $0x48] sm:$0xff]
    %v34 = vld [vmem:[%s1 + $0x50] sm:$0xff]
    %v35 = vld [vmem:[%s1 + $0x58] sm:$0xff]
    %v36 = vld [vmem:[%s1 + $0x60] sm:$0xff]
    %v37 = vld [vmem:[%s1 + $0x68] sm:$0xff]
    %v38 = vld [vmem:[%s1 + $0x70] sm:$0xff]
    %v39 = vld [vmem:[%s1 + $0x78] sm:$0xff]
    %v40 = vld [vmem:[%s1 + $0x80] sm:$0xff]
    %v41 = vld [vmem:[%s1 + $0x88] sm:$0xff]
    %v42 = vld [vmem:[%s1 + $0x90] sm:$0xff]
    %v43 = vld [vmem:[%s1 + $0x98] sm:$0xff]
    %v44 = vld [vmem:[%s1 + $0xa0] sm:$0xff]
    %v45 = vld [vmem:[%s1 + $0xa8] sm:$0xff]
    %v46 = vld [vmem:[%s1 + $0xb0] sm:$0xff]
    %v47 = vld [vmem:[%s1 + $0xb8] sm:$0xff]
    %vm48 = vcmask 523264
    %v50 = vsel %vm48, %v23, 0
    %52 = vmatprep.subr.mxu0 0.0
    %53 = vmatpush1.msra.mxu0 %v24
    %54 = vmatprep.subr.mxu0 0.0
    %55 = vmatpush1.msra.mxu0 %v25
    %56 = vmatprep.subr.mxu0 0.0
    %57 = vmatpush1.msra.mxu0 %v26
    %58 = vmatprep.subr.mxu0 0.0
    %59 = vmatpush1.msra.mxu0 %v27
    %60 = vmatprep.subr.mxu0 0.0
    %61 = vmatpush1.msra.mxu0 %v28
    %62 = vmatprep.subr.mxu0 0.0
    %63 = vmatpush1.msra.mxu0 %v29
    %64 = vmatprep.subr.mxu0 0.0
    %65 = vmatpush1.msra.mxu0 %v30
    %66 = vmatprep.subr.mxu0 0.0
    %67 = vmatpush1.msra.mxu0 %v31
    %68 = vmatprep.subr.mxu0 0.0
    %69 = vmatpush1.msra.mxu0 %v32
    %70 = vmatprep.subr.mxu0 0.0
    %71 = vmatpush1.msra.mxu0 %v33
    %72 = vmatprep.subr.mxu0 0.0
    %73 = vmatpush1.msra.mxu0 %v34
    %74 = vmatprep.subr.mxu0 0.0
    %75 = vmatpush1.msra.mxu0 %v35
    %76 = vmatprep.subr.mxu0 0.0
    %77 = vmatpush1.msra.mxu0 %v36
    %78 = vmatprep.subr.mxu0 0.0
    %79 = vmatpush1.msra.mxu0 %v37
    %80 = vmatprep.subr.mxu0 0.0
    %81 = vmatpush1.msra.mxu0 %v38
    %82 = vmatprep.subr.mxu0 0.0
    %83 = vmatpush1.msra.mxu0 %v39
    %84 = vmatprep.subr.mxu0 0.0
    %85 = vmatpush1.msra.mxu0 %v40
    %86 = vmatprep.subr.mxu0 0.0
    %87 = vmatpush1.msra.mxu0 %v41
    %88 = vmatprep.subr.mxu0 0.0
    %89 = vmatpush1.msra.mxu0 %v42
    %90 = vmatprep.subr.mxu0 0.0
    %91 = vmatpush1.msra.mxu0 %v43
    %92 = vmatprep.subr.mxu0 0.0
    %93 = vmatpush1.msra.mxu0 %v44
    %94 = vmatprep.subr.mxu0 0.0
    %95 = vmatpush1.msra.mxu0 %v45
    %96 = vmatprep.subr.mxu0 0.0
    %97 = vmatpush1.msra.mxu0 %v46
    %98 = vmatprep.subr.mxu0 0.0
    %99 = vmatpush1.msra.mxu0 %v47
    %100 = vmatprep.subr.mxu0 0.0
    %101 = vmatpush1.msra.mxu0 0.0
    %102 = vmatprep.subr.mxu0 0.0
    %103 = vmatpush1.msra.mxu0 0.0
    %104 = vmatprep.subr.mxu0 0.0
    %105 = vmatpush1.msra.mxu0 0.0
    %106 = vmatprep.subr.mxu0 0.0
    %107 = vmatpush1.msra.mxu0 0.0
    %108 = vmatprep.subr.mxu0 0.0
    %109 = vmatpush1.msra.mxu0 0.0
    %110 = vmatprep.subr.mxu0 0.0
    %111 = vmatpush1.msra.mxu0 0.0
    %112 = vmatprep.subr.mxu0 0.0
    %113 = vmatpush1.msra.mxu0 0.0
    %114 = vmatprep.subr.mxu0 0.0
    %115 = vmatpush1.msra.mxu0 0.0
    %116 = vmatprep.mubr.f32.mxu0 %v50
    %117 = vmatmul.mubr.f32.gmra.mrb[0].mxu0 %v22
    %v118 = vpop.f32.mrb[0].mxu0
    %v119 = vadd.f32 0.0, %v118
    %v120 = vpop.f32.mrb[0].mxu0
    %121 = vdwg.mxu0
    %v122 = vadd.f32 %v21, %v119
    %vm123 = vcmask 261120
    %124 = vst.msk [vmem:[#allocation2] sm:$0xff] %vm123, %v122
    // Predicated region
    $region18: #{tpu_custom_call.1} parent=1 // pred_check
      %p125 = pneg %p15
    $region19: #{tpu_custom_call.1} parent=1 // pred_check_branch
      %127 = sbr.rel (%p125) target = $region21
    $region20: #{tpu_custom_call.1} parent=1 // pred_region
      %v128 = vld [vmem:[#allocation2] sm:$0xff]
      %v129 = vld [vmem:[%s2] sm:$0x1]
      %v131 = vlaneseq
      %v132 = vshrl.u32 %v131, 7
      %v133 = vsub.s32 0, %v132
      %v134 = vrot.slane %v129, %v133
      %v136 = vadd.f32 %v128, %v134
      %137 = vst.msk [vmem:[#allocation3] sm:$0xff] %vm123, %v136
    $region21: #{tpu_custom_call.1} parent=1 // pred_fallthru
      _
    // Predicated region
    $region22: #{tpu_custom_call.1} parent=1 // pred_check
      _
    $region23: #{tpu_custom_call.1} parent=1 // pred_check_branch
      %139 = sbr.rel (0) target = $region25
    $region24: #{tpu_custom_call.1} parent=1 // pred_region
      %s141 = ssub.s32 128, 128
      %142 = vsyncadd [#allocation4], %s141
      %s144 = sshll.u32 [#allocation3], 4
      %s145 = int_to_ptr.vmem [resolvable:$true] %s144
      %147 = dma.vmem_to_hbm [thread:$0]  %s145, 128, %s3, [#allocation4]
    $region25: #{tpu_custom_call.1} parent=1 // pred_fallthru
      _
    // Predicated region
    $region26: #{tpu_custom_call.1} parent=1 // pred_check
      _
    $region27: #{tpu_custom_call.1} parent=1 // pred_check_branch
      %149 = sbr.rel (0) target = $region29
    $region28: #{tpu_custom_call.1} parent=1 // pred_region
      %150 = dma.done [#allocation4], 128
    $region29: #{tpu_custom_call.1} parent=1 // pred_fallthru
      _
    %151 = vsyncpa [#allocation4], 1

</llo_original>
